<compile_context>
chip_gen: v7x
topology: tpu7x:2x2x1
jax: 0.10.0
libtpu: 0.0.40
codegen_flags: <defaults>
</compile_context>

<pallas_src>
import functools

import jax
import jax.numpy as jnp
from jax import lax
from jax.experimental import pallas as pl
from jax.experimental.pallas import tpu as pltpu


def _focal_loss_kernel(logits_ref, targets_ref, out_ref, *, gamma, alpha,
                       n_valid, tile_n):
    """One N-tile: row-wise focal loss, masked, reduced to one partial sum."""
    i = pl.program_id(0)

    # Cast to f32 in-kernel so only native-dtype bytes cross HBM (v5e has no
    # bf16 VPU/EUP path, so compute stays f32 everywhere).
    logits = logits_ref[...].astype(jnp.float32)              # (tn, C)
    targets = targets_ref[...]                                 # (tn, 1) int32
    tn, c = logits.shape

    # --- numerically stable softmax pieces (row-wise) -----------------------
    row_max = jnp.max(logits, axis=-1, keepdims=True)          # (tn, 1)
    shifted = logits - row_max                                  # (tn, C)
    exps = jnp.exp(shifted)                                     # (tn, C)  EUP
    sumexp = jnp.sum(exps, axis=-1, keepdims=True)              # (tn, 1)

    # fused one-hot gather of the target logit (no f32 onehot temporary)
    class_ids = lax.broadcasted_iota(jnp.int32, (tn, c), dimension=1)
    tgt_shifted = jnp.sum(
        jnp.where(class_ids == targets, shifted, 0.0),
        axis=-1, keepdims=True)                                  # (tn, 1)

    # cross_entropy(reduction='none') and pt = exp(-ce), as in the torch module
    ce = jnp.log(sumexp) - tgt_shifted                           # (tn, 1)
    pt = jnp.exp(-ce)                                            # (tn, 1)
    one_m_pt = 1.0 - pt

    if float(gamma).is_integer() and 0 <= int(gamma) <= 8:
        # integer gamma -> repeated multiply; avoids pow (= exp+log) on the EUP
        w = jnp.ones_like(one_m_pt)
        for _ in range(int(gamma)):
            w = w * one_m_pt
    else:
        # clamp so rounding (pt marginally > 1) cannot feed log a negative value
        safe = jnp.maximum(one_m_pt, 0.0)
        w = jnp.exp(jnp.float32(gamma) * jnp.log(safe))

    f = alpha * w * ce                                           # (tn, 1)

    # mask rows past the true batch size (the ragged last tile reads
    # unspecified data; select does not propagate the unselected operand)
    row_ids = i * tile_n + lax.broadcasted_iota(jnp.int32, (tn, 1), dimension=0)
    f = jnp.where(row_ids < n_valid, f, 0.0)

    # per-tile partial sum, stored as a lane-dense (1, 8, 128) slab so the
    # store is a full unmasked vst and output traffic is ~4 KiB per tile
    s = jnp.sum(f)
    out_ref[...] = jnp.broadcast_to(s, out_ref.shape)


_SUBLANE_MULT = {2: 16, 1: 32}   # bf16 -> 16, int8/fp8 -> 32, default 8 (f32)


def _choose_tile_n(n, c, itemsize, vmem_budget):
    """Batch-tile size: ~3 MiB of native-dtype logits per block, bounded by the
    generation-aware VMEM budget (double-buffered input + ~4 live f32 temps)."""
    mult = _SUBLANE_MULT.get(int(itemsize), 8)
    t_stream = (3 * 1024 * 1024) // max(c * itemsize, 1)
    bytes_per_row = 2 * c * itemsize + 4 * c * 4
    t_vmem = vmem_budget // max(bytes_per_row, 1)
    cap = 2048 if c <= 1024 else 1024
    t = min(t_stream, t_vmem, cap)
    t = max((t // mult) * mult, mult)
    if t >= n:
        return int(n)          # block == full dim is always a legal tiling
    return int(t)


def focal_loss(logits, targets, gamma=2.0, alpha=0.25, tile_n=None):
    """logits: (N, C) float (any float dtype); targets: (N,) int. Scalar f32."""
    n, c = logits.shape
    itemsize = jnp.dtype(logits.dtype).itemsize
    targets2d = targets.astype(jnp.int32).reshape(n, 1)

    # Generation-aware VMEM ceiling: 48 MiB on 128-MiB parts (v5e/v6e),
    # ~24 MiB on 64-MiB parts (v7x).
    try:
        vmem_cap = int(pltpu.get_tpu_info().vmem_capacity_bytes)
    except Exception:
        vmem_cap = 64 * 1024 * 1024          # conservative fallback (v7x-sized)
    vmem_limit = max(min(48 * 1024 * 1024, (3 * vmem_cap) // 8), 8 * 1024 * 1024)

    if tile_n is None:
        tile_n = _choose_tile_n(n, c, itemsize, vmem_limit // 2)
    tile_n = int(min(max(tile_n, 1), n))
    num_tiles = -(-n // tile_n)              # ragged last block, no padding

    kernel = functools.partial(
        _focal_loss_kernel,
        gamma=float(gamma), alpha=float(alpha),
        n_valid=n, tile_n=tile_n,
    )

    partials = pl.pallas_call(
        kernel,
        out_shape=jax.ShapeDtypeStruct((num_tiles, 8, 128), jnp.float32),
        grid_spec=pl.GridSpec(
            grid=(num_tiles,),
            in_specs=[
                pl.BlockSpec((tile_n, c), lambda i: (i, 0)),
                pl.BlockSpec((tile_n, 1), lambda i: (i, 0)),
            ],
            out_specs=pl.BlockSpec((1, 8, 128), lambda i: (i, 0, 0)),
        ),
        compiler_params=pltpu.CompilerParams(
            dimension_semantics=("parallel",),
            vmem_limit_bytes=int(vmem_limit),
        ),
        cost_estimate=pl.CostEstimate(
            flops=10 * n * c,
            transcendentals=n * (c + 3),
            bytes_accessed=n * c * itemsize + n * 4 + num_tiles * 8 * 128 * 4,
        ),
    )(logits, targets2d)

    # tiny final reduction over num_tiles partial sums
    return jnp.sum(partials[:, 0, 0]) / jnp.float32(n)


def _focal_loss_ref(logits, targets, gamma=2.0, alpha=0.25):
    # pure-JAX reference mirroring F.cross_entropy(reduction='none') + focal
    logits = logits.astype(jnp.float32)
    lse = jax.nn.logsumexp(logits, axis=-1)
    tgt = jnp.take_along_axis(logits, targets[:, None], axis=-1)[:, 0]
    ce = lse - tgt
    pt = jnp.exp(-ce)
    return jnp.mean(alpha * (1.0 - pt) ** gamma * ce)


if __name__ == "__main__":
    key = jax.random.PRNGKey(0)
    k1, k2, k3, k4 = jax.random.split(key, 4)

    # small shape consistent with the module: batch of 8 samples, 32 classes
    N, C = 8, 32
    logits = jax.random.normal(k1, (N, C), dtype=jnp.float32)
    targets = jax.random.randint(k2, (N,), 0, C, dtype=jnp.int32)

    loss = focal_loss(logits, targets, gamma=2.0, alpha=0.25)
    jax.block_until_ready(loss)
    ref = _focal_loss_ref(logits, targets, gamma=2.0, alpha=0.25)
    assert jnp.allclose(loss, ref, atol=1e-5, rtol=1e-5), (loss, ref)

    # non-integer gamma exercises the clamped pow path
    loss_g = focal_loss(logits, targets, gamma=1.5, alpha=0.25)
    jax.block_until_ready(loss_g)
    ref_g = _focal_loss_ref(logits, targets, gamma=1.5, alpha=0.25)
    assert jnp.allclose(loss_g, ref_g, atol=1e-5, rtol=1e-5), (loss_g, ref_g)

    # multi-tile + ragged (unpadded) last block + in-kernel masking
    N2, C2 = 50, 96
    logits2 = jax.random.normal(k3, (N2, C2), dtype=jnp.float32)
    targets2 = jax.random.randint(k4, (N2,), 0, C2, dtype=jnp.int32)
    loss2 = focal_loss(logits2, targets2, tile_n=16)   # 4 tiles, last has 2 rows
    jax.block_until_ready(loss2)
    ref2 = _focal_loss_ref(logits2, targets2)
    assert jnp.allclose(loss2, ref2, atol=1e-5, rtol=1e-5), (loss2, ref2)

    # bf16 logits stay bf16 over HBM->VMEM; kernel casts to f32 internally
    logits_bf16 = logits.astype(jnp.bfloat16)
    loss_bf16 = focal_loss(logits_bf16, targets)
    jax.block_until_ready(loss_bf16)
    ref_bf16 = _focal_loss_ref(logits_bf16.astype(jnp.float32), targets)
    assert jnp.allclose(loss_bf16, ref_bf16, atol=1e-4, rtol=1e-4), (loss_bf16, ref_bf16)

    print("KERNEL_OK")
</pallas_src>

<mosaic_0001>
module attributes {stable_mosaic.version = 11 : i64} {
  func.func @_focal_loss_kernel(%arg0: i32, %arg1: memref<8x32xf32, #tpu.memory_space<vmem>>, %arg2: memref<8x1xi32, #tpu.memory_space<vmem>>, %arg3: memref<1x8x128xf32, #tpu.memory_space<vmem>>) attributes {dimension_semantics = [#tpu.dimension_semantics<parallel>], iteration_bounds = array<i64: 1>, scalar_prefetch = 0 : i64, scratch_operands = 0 : i64, tpu.core_type = #tpu.core_type<tc>, window_params = [{transform_indices = @transform_0, window_bounds = array<i64: 8, 32>}, {transform_indices = @transform_1, window_bounds = array<i64: 8, 1>}, {transform_indices = @transform_2, window_bounds = array<i64: 1, 8, 128>}]} {
    %c0 = arith.constant 0 : index
    %c0_0 = arith.constant 0 : index
    %0 = vector.load %arg1[%c0, %c0_0] : memref<8x32xf32, #tpu.memory_space<vmem>>, vector<8x32xf32>
    %c0_1 = arith.constant 0 : index
    %c0_2 = arith.constant 0 : index
    %1 = vector.load %arg2[%c0_1, %c0_2] : memref<8x1xi32, #tpu.memory_space<vmem>>, vector<8x1xi32>
    %cst = arith.constant dense<0xFF800000> : vector<8xf32>
    %2 = vector.multi_reduction <maximumf>, %0, %cst [1] : vector<8x32xf32> to vector<8xf32>
    %3 = vector.shape_cast %2 : vector<8xf32> to vector<8x1xf32>
    %4 = vector.broadcast %3 : vector<8x1xf32> to vector<8x32xf32>
    %5 = arith.subf %0, %4 : vector<8x32xf32>
    %6 = math.exp %5 : vector<8x32xf32>
    %cst_3 = arith.constant dense<0.000000e+00> : vector<8xf32>
    %7 = vector.multi_reduction <add>, %6, %cst_3 [1] : vector<8x32xf32> to vector<8xf32>
    %8 = vector.shape_cast %7 : vector<8xf32> to vector<8x1xf32>
    %9 = tpu.iota {dimensions = array<i32: 1>} : vector<8x32xi32>
    %10 = vector.broadcast %1 : vector<8x1xi32> to vector<8x32xi32>
    %11 = arith.cmpi eq, %9, %10 : vector<8x32xi32>
    %cst_4 = arith.constant 0.000000e+00 : f32
    %12 = vector.broadcast %cst_4 : f32 to vector<8x32xf32>
    %13 = arith.select %11, %5, %12 : vector<8x32xi1>, vector<8x32xf32>
    %cst_5 = arith.constant dense<0.000000e+00> : vector<8xf32>
    %14 = vector.multi_reduction <add>, %13, %cst_5 [1] : vector<8x32xf32> to vector<8xf32>
    %15 = vector.shape_cast %14 : vector<8xf32> to vector<8x1xf32>
    %16 = math.log %8 : vector<8x1xf32>
    %17 = arith.subf %16, %15 : vector<8x1xf32>
    %cst_6 = arith.constant 0.000000e+00 : f32
    %18 = vector.broadcast %cst_6 : f32 to vector<8x1xf32>
    %19 = arith.subf %18, %17 : vector<8x1xf32>
    %20 = math.exp %19 : vector<8x1xf32>
    %cst_7 = arith.constant 1.000000e+00 : f32
    %21 = vector.broadcast %cst_7 : f32 to vector<8x1xf32>
    %22 = arith.subf %21, %20 : vector<8x1xf32>
    %cst_8 = arith.constant 1.000000e+00 : f32
    %23 = vector.broadcast %cst_8 : f32 to vector<8x1xf32>
    %24 = arith.mulf %23, %22 : vector<8x1xf32>
    %25 = arith.mulf %24, %22 : vector<8x1xf32>
    %cst_9 = arith.constant 2.500000e-01 : f32
    %26 = vector.broadcast %cst_9 : f32 to vector<8x1xf32>
    %27 = arith.mulf %26, %25 : vector<8x1xf32>
    %28 = arith.mulf %27, %17 : vector<8x1xf32>
    %c8_i32 = arith.constant 8 : i32
    %29 = arith.muli %arg0, %c8_i32 : i32
    %30 = tpu.iota {dimensions = array<i32: 0>} : vector<8x1xi32>
    %31 = vector.broadcast %29 : i32 to vector<8x1xi32>
    %32 = arith.addi %31, %30 : vector<8x1xi32>
    %c8_i32_10 = arith.constant 8 : i32
    %33 = vector.broadcast %c8_i32_10 : i32 to vector<8x1xi32>
    %34 = arith.cmpi slt, %32, %33 : vector<8x1xi32>
    %cst_11 = arith.constant 0.000000e+00 : f32
    %35 = vector.broadcast %cst_11 : f32 to vector<8x1xf32>
    %36 = arith.select %34, %28, %35 : vector<8x1xi1>, vector<8x1xf32>
    %37 = vector.shape_cast %36 : vector<8x1xf32> to vector<1x8x1xf32>
    %cst_12 = arith.constant dense<0.000000e+00> : vector<1xf32>
    %38 = vector.multi_reduction <add>, %37, %cst_12 [1, 2] : vector<1x8x1xf32> to vector<1xf32>
    %39 = vector.shape_cast %38 : vector<1xf32> to vector<1x1x1xf32>
    %40 = vector.extract %39[0, 0, 0] : f32 from vector<1x1x1xf32>
    %41 = vector.broadcast %40 : f32 to vector<1x8x128xf32>
    %c0_13 = arith.constant 0 : index
    %c0_14 = arith.constant 0 : index
    %c0_15 = arith.constant 0 : index
    %42 = vector.load %arg3[%c0_13, %c0_14, %c0_15] : memref<1x8x128xf32, #tpu.memory_space<vmem>>, vector<1x8x128xf32>
    tpu.vector_store %arg3[%c0_13, %c0_14, %c0_15], %41 {strides = array<i32>} : memref<1x8x128xf32, #tpu.memory_space<vmem>>, vector<1x8x128xf32>,
    return
  }
  func.func @transform_0(%arg0: i32) -> (i32, i32) {
    %c0_i32 = arith.constant 0 : i32
    %c0_i32_0 = arith.constant 0 : i32
    return %arg0, %c0_i32 : i32, i32
  }
  func.func @transform_1(%arg0: i32) -> (i32, i32) {
    %c0_i32 = arith.constant 0 : i32
    %c0_i32_0 = arith.constant 0 : i32
    return %arg0, %c0_i32 : i32, i32
  }
  func.func @transform_2(%arg0: i32) -> (i32, i32, i32) {
    %c0_i32 = arith.constant 0 : i32
    %c0_i32_0 = arith.constant 0 : i32
    %c0_i32_1 = arith.constant 0 : i32
    return %arg0, %c0_i32, %c0_i32_0 : i32, i32, i32
  }
}

</mosaic_0001>

<llo_original>
// kernel: tpu_custom_call.1
$region0: #{tpu_custom_call.1}
  #allocation0 [shape = 'u32[]', space=smem, size = 0x4, offset = 0x4, fixed_abs, tag = 'smem constant byte address 0x4 - core index']
  #allocation1 [shape = 'u32[144,128]{1,0:T(1,128)}', space=vmem, size = 0x12000, scoped, tag = 'internal scratch']
  %s0 = inlined_call_operand.vmem [shape: f32[8,32], index: 0, kind: input, shape index: {}]
  %s1 = inlined_call_operand.vmem [shape: s32[8,1], index: 1, kind: input, shape index: {}]
  %s2 = inlined_call_operand.hbm [shape: f32[1,8,128], index: 2, kind: output, shape index: {}]
  %s3 = sld [smem:[#allocation0]]
  $region18: #{tpu_custom_call.1} parent=0
    _
  %s5 = ssub.s32 1, %s3
  %s6 = scalar_select 0, %s5, %s3
  $region1: #{tpu_custom_call.1} parent=0
    #allocation2 [shape = 'u8[4096]{0}', space=vmem, size = 0x1000, scoped, tag = 'output window, operand 0, single buffered']
    #allocation3 [shape = 's32[1]{0}', space=sflag, size = 0x4, scoped, tag = 'scoped memory for tpu_custom_call.1']
    %7 = vsyncpa [#allocation3], 0
    // Predicated region
    $region2: #{tpu_custom_call.1} parent=1 // pred_check
      _
    $region3: #{tpu_custom_call.1} parent=1 // pred_check_branch
      %9 = sbr.rel (0) target = $region5
    $region4: #{tpu_custom_call.1} parent=1 // pred_region
      _
    $region5: #{tpu_custom_call.1} parent=1 // pred_fallthru
      _
    // Predicated region
    $region6: #{tpu_custom_call.1} parent=1 // pred_check
      _
    $region7: #{tpu_custom_call.1} parent=1 // pred_check_branch
      %11 = sbr.rel (0) target = $region9
    $region8: #{tpu_custom_call.1} parent=1 // pred_region
      _
    $region9: #{tpu_custom_call.1} parent=1 // pred_fallthru
      _
    %v12 = vld [vmem:[%s0] sm:$0xff]
    %v13 = vld [vmem:[%s1] sm:$0xff]
    %vm14 = vcmask 261120
    %v15 = vsel %vm14, %v12, -inf
    %16 = vmax.xlane.f32.xlu0 %v15
    %v17 = vpop.xlane.xlu0 %16
    %v18 = vsub.f32 %v12, %v17
    %v19 = vmul.f32 %v18, 1.442695
    %v20 = vpow.pop %v19
    %v21 = vsel %vm14, %v20, 0.0
    %22 = vadd.xlane.f32.xlu0 %v21
    %v23 = vpop.xlane.xlu0 %22
    %v24 = vlaneseq
    %v25 = vand.u32 %v24, 127
    %26 = vset.pattern.permute.xlu0 0
    %27 = vperm.xlu0 %26, %v13
    %v28 = vpop.permute.xlu0 %27
    %vm29 = vcmp.eq.s32.totalorder %v25, %v28
    %v30 = vsel %vm29, %v18, 0.0
    %v31 = vsel %vm14, %v30, 0.0
    %32 = vadd.xlane.f32.xlu0 %v31
    %v33 = vpop.xlane.xlu0 %32
    %v34 = vlog2.pop %v23
    %v35 = vmul.f32 %v34, 0.6931472
    %v36 = vsub.f32 %v35, %v33
    %v37 = vsub.f32 0.0, %v36
    %v38 = vmul.f32 %v37, 1.442695
    %v39 = vpow.pop %v38
    %v40 = vsub.f32 1.0, %v39
    %v41 = vmul.f32 %v40, %v40
    %v42 = vmul.f32 %v41, 0.25
    %v43 = vmul.f32 %v42, %v36
    %s44 = smul.u32 0, 8
    %v45 = vlaneseq
    %v46 = vshrl.u32 %v45, 7
    %v47 = vstv %s44
    %v48 = vadd.s32 %v47, %v46
    %vm49 = vcmp.lt.s32.totalorder %v48, 8
    %v50 = vsel %vm49, %v43, 0.0
    %vm51 = vcmask 7168
    %v52 = vsel %vm51, %v50, 0.0
    %53 = vadd.xlane.f32.xlu0 %v52
    %v54 = vpop.xlane.xlu0 %53
    %v55 = vrot.slane %v54, 4
    %v56 = vadd.f32 %v54, %v55
    %v57 = vrot.slane %v56, 2
    %v58 = vadd.f32 %v56, %v57
    %v59 = vrot.slane %v58, 1
    %v60 = vadd.f32 %v58, %v59
    %s61 = vtos %v60
    %v62 = vstv %s61
    %63 = vst [vmem:[#allocation2] sm:$0xff] %v62
    // Predicated region
    $region10: #{tpu_custom_call.1} parent=1 // pred_check
      _
    $region11: #{tpu_custom_call.1} parent=1 // pred_check_branch
      %65 = sbr.rel (0) target = $region13
    $region12: #{tpu_custom_call.1} parent=1 // pred_region
      %s67 = ssub.s32 128, 128
      %68 = vsyncadd [#allocation3], %s67
      %s70 = sshll.u32 [#allocation2], 4
      %s71 = int_to_ptr.vmem [resolvable:$true] %s70
      %73 = dma.vmem_to_hbm [thread:$0]  %s71, 128, %s2, [#allocation3]
    $region13: #{tpu_custom_call.1} parent=1 // pred_fallthru
      _
    // Predicated region
    $region14: #{tpu_custom_call.1} parent=1 // pred_check
      _
    $region15: #{tpu_custom_call.1} parent=1 // pred_check_branch
      %75 = sbr.rel (0) target = $region17
    $region16: #{tpu_custom_call.1} parent=1 // pred_region
      %76 = dma.done [#allocation3], 128
    $region17: #{tpu_custom_call.1} parent=1 // pred_fallthru
      _
    %77 = vsyncpa [#allocation3], 1

</llo_original>
